<compile_context>
chip_gen: v6e
topology: v6e:2x2x1
jax: 0.10.0
libtpu: 0.0.40
codegen_flags: <defaults>
</compile_context>

<pallas_src>
import jax
import jax.numpy as jnp
from jax.experimental import pallas as pl
from jax.experimental.pallas import tpu as pltpu


def _round_up(n, m):
    return ((n + m - 1) // m) * m


def _cpnet_kernel(a_ref,                       # (1,) PReLU slope in SMEM
                  x_ref,                       # (TB, M)          f32
                  w1_ref, b1_ref,              # (M,  H1p) bf16, (1, H1p) f32  [BN folded]
                  w2_ref, b2_ref,              # (H1p,H2p) bf16, (1, H2p) f32  [BN folded]
                  w3_ref, b3_ref,              # (H2p,H3p) bf16, (1, H3p) f32  [BN folded]
                  wh_ref, bh_ref,              # (H3p,Cp ) bf16, (1, Cp ) f32
                  o_ref):                      # (TB, Cp)         f32 (lane-dense)
    a = a_ref[0]

    def prelu(z):                               # f32 elementwise
        return jnp.where(z >= 0, z, a * z)

    def layer(h_f32, w_ref, b_ref):
        # bf16 operands on the MXU, f32 accumulation; bias + PReLU in f32.
        z = jnp.dot(h_f32.astype(jnp.bfloat16), w_ref[...],
                    preferred_element_type=jnp.float32) + b_ref[...]
        return prelu(z)

    h = x_ref[...].astype(jnp.float32)
    h = layer(h, w1_ref, b1_ref)
    h = layer(h, w2_ref, b2_ref)
    h = layer(h, w3_ref, b3_ref)
    out = jnp.dot(h.astype(jnp.bfloat16), wh_ref[...],
                  preferred_element_type=jnp.float32) + bh_ref[...]
    o_ref[...] = out.astype(o_ref.dtype)        # full unmasked vst (Cp % 128 == 0)


def cpnet_forward(x, params, *, tb=None):
    """x: (B, M) float32. params: dict from make_params (folded + padded)."""
    B, M = x.shape
    H1p = params["w1"].shape[1]
    H2p = params["w2"].shape[1]
    H3p = params["w3"].shape[1]
    Cp = params["wh"].shape[1]
    C = params["C"]

    # --- batch tiling: big lane/sublane-dense tiles, pad the tail instead of
    #     forcing tb to divide B. Tiny batches -> single grid step.
    if tb is None:
        tb = 256                                   # MXU-filling default
    tb = max(8, _round_up(min(tb, _round_up(B, 8)), 8))
    Bp = _round_up(B, tb)
    xp = x if Bp == B else jnp.pad(x, ((0, Bp - B), (0, 0)))
    grid = (Bp // tb,)

    full = lambda shape: pl.BlockSpec(shape, lambda i: (0, 0))

    out = pl.pallas_call(
        _cpnet_kernel,
        out_shape=jax.ShapeDtypeStruct((Bp, Cp), x.dtype),
        grid_spec=pltpu.PrefetchScalarGridSpec(
            num_scalar_prefetch=0,
            grid=grid,
            in_specs=[
                pl.BlockSpec(memory_space=pltpu.SMEM),            # PReLU a
                pl.BlockSpec((tb, M), lambda i: (i, 0)),          # x tile
                full((M, H1p)), full((1, H1p)),
                full((H1p, H2p)), full((1, H2p)),
                full((H2p, H3p)), full((1, H3p)),
                full((H3p, Cp)), full((1, Cp)),
            ],
            out_specs=pl.BlockSpec((tb, Cp), lambda i: (i, 0)),
        ),
        compiler_params=pltpu.CompilerParams(
            dimension_semantics=("parallel",)),
    )(params["a"], xp,
      params["w1"], params["b1"],
      params["w2"], params["b2"],
      params["w3"], params["b3"],
      params["wh"], params["bh"])

    return out[:B, :C]


# ---------------------------------------------------------------------------
# Parameter construction (deterministic, PyTorch-like shapes) + BN folding +
# lane padding + bf16 cast of matmul operands.
# ---------------------------------------------------------------------------
def _linear_init(key, fan_in, fan_out):
    kw, kb = jax.random.split(key)
    bound = 1.0 / jnp.sqrt(jnp.float32(fan_in))
    w = jax.random.uniform(kw, (fan_out, fan_in), jnp.float32, -bound, bound)
    b = jax.random.uniform(kb, (fan_out,), jnp.float32, -bound, bound)
    return w, b


def _bn_init(key, h):
    k1, k2, k3 = jax.random.split(key, 3)
    gamma = 1.0 + 0.1 * jax.random.normal(k1, (h,), jnp.float32)
    beta = 0.1 * jax.random.normal(k2, (h,), jnp.float32)
    running_mean = 0.1 * jax.random.normal(k3, (h,), jnp.float32)
    running_var = jnp.ones((h,), jnp.float32)
    return gamma, beta, running_mean, running_var


def _fold(w, b, gamma, beta, mean, var, eps=1e-5):
    # eval-mode BN folded into the preceding linear:
    #   y = (xW^T + b - mean) * gamma/sqrt(var+eps) + beta
    scale = gamma / jnp.sqrt(var + eps)
    shift = beta - mean * scale
    w_f = (w * scale[:, None]).T          # (in, out)
    b_f = (b * scale + shift)[None, :]    # (1, out)
    return w_f.astype(jnp.float32), b_f.astype(jnp.float32)


def _pad_w(w, in_p, out_p):
    return jnp.pad(w, ((0, in_p - w.shape[0]), (0, out_p - w.shape[1])))


def _pad_b(b, out_p):
    return jnp.pad(b, ((0, 0), (0, out_p - b.shape[1])))


def make_params(key, M, H1, H2, H3, C):
    ks = jax.random.split(key, 8)
    w1, b1 = _linear_init(ks[0], M, H1)
    w2, b2 = _linear_init(ks[1], H1, H2)
    w3, b3 = _linear_init(ks[2], H2, H3)
    wh, bh = _linear_init(ks[3], H3, C)
    bn1 = _bn_init(ks[4], H1)
    bn2 = _bn_init(ks[5], H2)
    bn3 = _bn_init(ks[6], H3)
    a = jnp.full((1,), 0.25, jnp.float32)   # PReLU default init

    w1f, b1f = _fold(w1, b1, *bn1)          # (M, H1), (1, H1)
    w2f, b2f = _fold(w2, b2, *bn2)          # (H1, H2), (1, H2)
    w3f, b3f = _fold(w3, b3, *bn3)          # (H2, H3), (1, H3)
    whf = wh.T.astype(jnp.float32)          # (H3, C)
    bhf = bh[None, :].astype(jnp.float32)   # (1, C)

    # Zero-pad hidden / output dims to 128-lane multiples (lane-dense vregs,
    # dense MXU tiles, unmasked output stores). Zeros propagate exactly:
    # padded hidden activations are PReLU(0) = 0 and contribute nothing.
    H1p, H2p, H3p, Cp = (_round_up(d, 128) for d in (H1, H2, H3, C))
    bf16 = jnp.bfloat16
    return {
        "a": a,
        "C": C,
        "w1": _pad_w(w1f, M,   H1p).astype(bf16), "b1": _pad_b(b1f, H1p),
        "w2": _pad_w(w2f, H1p, H2p).astype(bf16), "b2": _pad_b(b2f, H2p),
        "w3": _pad_w(w3f, H2p, H3p).astype(bf16), "b3": _pad_b(b3f, H3p),
        "wh": _pad_w(whf, H3p, Cp).astype(bf16),  "bh": _pad_b(bhf, Cp),
    }


def reference_forward(x, params):
    """Pure-JAX reference matching the kernel math (bf16 operands, f32 acc)."""
    a = params["a"][0]
    prelu = lambda z: jnp.where(z >= 0, z, a * z)
    bf16, f32 = jnp.bfloat16, jnp.float32

    def layer(h, w, b):
        return prelu(jnp.dot(h.astype(bf16), w, preferred_element_type=f32) + b)

    h = x.astype(f32)
    h = layer(h, params["w1"], params["b1"])
    h = layer(h, params["w2"], params["b2"])
    h = layer(h, params["w3"], params["b3"])
    out = jnp.dot(h.astype(bf16), params["wh"],
                  preferred_element_type=f32) + params["bh"]
    return out[:, :params["C"]]


if __name__ == "__main__":
    B, M, H1, H2, H3, C = 16, 32, 64, 48, 32, 4
    key = jax.random.PRNGKey(0)
    kx, kp = jax.random.split(key)
    x = jax.random.normal(kx, (B, M), jnp.float32)
    params = make_params(kp, M, H1, H2, H3, C)

    out = cpnet_forward(x, params)          # B=16 -> single grid step
    out = jax.block_until_ready(out)

    ref = reference_forward(x, params)
    assert out.shape == (B, C)
    assert jnp.allclose(out, ref, atol=1e-3, rtol=1e-3), "mismatch vs JAX reference"
    print("KERNEL_OK")
</pallas_src>

<mosaic_0001>
module attributes {stable_mosaic.version = 11 : i64} {
  func.func @_cpnet_kernel(%arg0: i32, %arg1: memref<1xf32, #tpu.memory_space<smem>>, %arg2: memref<16x32xf32, #tpu.memory_space<vmem>>, %arg3: memref<32x128xbf16, #tpu.memory_space<vmem>>, %arg4: memref<1x128xf32, #tpu.memory_space<vmem>>, %arg5: memref<128x128xbf16, #tpu.memory_space<vmem>>, %arg6: memref<1x128xf32, #tpu.memory_space<vmem>>, %arg7: memref<128x128xbf16, #tpu.memory_space<vmem>>, %arg8: memref<1x128xf32, #tpu.memory_space<vmem>>, %arg9: memref<128x128xbf16, #tpu.memory_space<vmem>>, %arg10: memref<1x128xf32, #tpu.memory_space<vmem>>, %arg11: memref<16x128xf32, #tpu.memory_space<vmem>>) attributes {dimension_semantics = [#tpu.dimension_semantics<parallel>], iteration_bounds = array<i64: 1>, scalar_prefetch = 0 : i64, scratch_operands = 0 : i64, tpu.core_type = #tpu.core_type<tc>, window_params = [{transform_indices = @transform_0, window_bounds = array<i64: 1>}, {transform_indices = @transform_1, window_bounds = array<i64: 16, 32>}, {pipeline_mode = #tpu.pipeline_mode<synchronous>, transform_indices = @transform_2, window_bounds = array<i64: 32, 128>}, {pipeline_mode = #tpu.pipeline_mode<synchronous>, transform_indices = @transform_3, window_bounds = array<i64: 1, 128>}, {pipeline_mode = #tpu.pipeline_mode<synchronous>, transform_indices = @transform_4, window_bounds = array<i64: 128, 128>}, {pipeline_mode = #tpu.pipeline_mode<synchronous>, transform_indices = @transform_5, window_bounds = array<i64: 1, 128>}, {pipeline_mode = #tpu.pipeline_mode<synchronous>, transform_indices = @transform_6, window_bounds = array<i64: 128, 128>}, {pipeline_mode = #tpu.pipeline_mode<synchronous>, transform_indices = @transform_7, window_bounds = array<i64: 1, 128>}, {pipeline_mode = #tpu.pipeline_mode<synchronous>, transform_indices = @transform_8, window_bounds = array<i64: 128, 128>}, {pipeline_mode = #tpu.pipeline_mode<synchronous>, transform_indices = @transform_9, window_bounds = array<i64: 1, 128>}, {transform_indices = @transform_10, window_bounds = array<i64: 16, 128>}]} {
    %c0 = arith.constant 0 : index
    %0 = memref.load %arg1[%c0] : memref<1xf32, #tpu.memory_space<smem>>
    %c0_0 = arith.constant 0 : index
    %c0_1 = arith.constant 0 : index
    %1 = vector.load %arg2[%c0_0, %c0_1] : memref<16x32xf32, #tpu.memory_space<vmem>>, vector<16x32xf32>
    %2 = arith.truncf %1 : vector<16x32xf32> to vector<16x32xbf16>
    %c0_2 = arith.constant 0 : index
    %c0_3 = arith.constant 0 : index
    %3 = vector.load %arg3[%c0_2, %c0_3] : memref<32x128xbf16, #tpu.memory_space<vmem>>, vector<32x128xbf16>
    %cst = arith.constant dense<0.000000e+00> : vector<16x128xf32>
    %4 = tpu.matmul %2, %3, %cst {dimension_numbers = #tpu.dot_dimension_numbers<[1], [0], [0], [1], [0, 0, 1, 1], [], []>} : vector<16x32xbf16>, vector<32x128xbf16>, vector<16x128xf32> -> vector<16x128xf32>
    %c0_4 = arith.constant 0 : index
    %c0_5 = arith.constant 0 : index
    %5 = vector.load %arg4[%c0_4, %c0_5] : memref<1x128xf32, #tpu.memory_space<vmem>>, vector<1x128xf32>
    %6 = vector.broadcast %5 : vector<1x128xf32> to vector<16x128xf32>
    %7 = arith.addf %4, %6 : vector<16x128xf32>
    %cst_6 = arith.constant 0.000000e+00 : f32
    %8 = vector.broadcast %cst_6 : f32 to vector<16x128xf32>
    %9 = arith.cmpf oge, %7, %8 : vector<16x128xf32>
    %10 = vector.broadcast %0 : f32 to vector<16x128xf32>
    %11 = arith.mulf %10, %7 : vector<16x128xf32>
    %12 = arith.select %9, %7, %11 : vector<16x128xi1>, vector<16x128xf32>
    %13 = arith.truncf %12 : vector<16x128xf32> to vector<16x128xbf16>
    %c0_7 = arith.constant 0 : index
    %c0_8 = arith.constant 0 : index
    %14 = vector.load %arg5[%c0_7, %c0_8] : memref<128x128xbf16, #tpu.memory_space<vmem>>, vector<128x128xbf16>
    %cst_9 = arith.constant dense<0.000000e+00> : vector<16x128xf32>
    %15 = tpu.matmul %13, %14, %cst_9 {dimension_numbers = #tpu.dot_dimension_numbers<[1], [0], [0], [1], [0, 0, 1, 1], [], []>} : vector<16x128xbf16>, vector<128x128xbf16>, vector<16x128xf32> -> vector<16x128xf32>
    %c0_10 = arith.constant 0 : index
    %c0_11 = arith.constant 0 : index
    %16 = vector.load %arg6[%c0_10, %c0_11] : memref<1x128xf32, #tpu.memory_space<vmem>>, vector<1x128xf32>
    %17 = vector.broadcast %16 : vector<1x128xf32> to vector<16x128xf32>
    %18 = arith.addf %15, %17 : vector<16x128xf32>
    %cst_12 = arith.constant 0.000000e+00 : f32
    %19 = vector.broadcast %cst_12 : f32 to vector<16x128xf32>
    %20 = arith.cmpf oge, %18, %19 : vector<16x128xf32>
    %21 = vector.broadcast %0 : f32 to vector<16x128xf32>
    %22 = arith.mulf %21, %18 : vector<16x128xf32>
    %23 = arith.select %20, %18, %22 : vector<16x128xi1>, vector<16x128xf32>
    %24 = arith.truncf %23 : vector<16x128xf32> to vector<16x128xbf16>
    %c0_13 = arith.constant 0 : index
    %c0_14 = arith.constant 0 : index
    %25 = vector.load %arg7[%c0_13, %c0_14] : memref<128x128xbf16, #tpu.memory_space<vmem>>, vector<128x128xbf16>
    %cst_15 = arith.constant dense<0.000000e+00> : vector<16x128xf32>
    %26 = tpu.matmul %24, %25, %cst_15 {dimension_numbers = #tpu.dot_dimension_numbers<[1], [0], [0], [1], [0, 0, 1, 1], [], []>} : vector<16x128xbf16>, vector<128x128xbf16>, vector<16x128xf32> -> vector<16x128xf32>
    %c0_16 = arith.constant 0 : index
    %c0_17 = arith.constant 0 : index
    %27 = vector.load %arg8[%c0_16, %c0_17] : memref<1x128xf32, #tpu.memory_space<vmem>>, vector<1x128xf32>
    %28 = vector.broadcast %27 : vector<1x128xf32> to vector<16x128xf32>
    %29 = arith.addf %26, %28 : vector<16x128xf32>
    %cst_18 = arith.constant 0.000000e+00 : f32
    %30 = vector.broadcast %cst_18 : f32 to vector<16x128xf32>
    %31 = arith.cmpf oge, %29, %30 : vector<16x128xf32>
    %32 = vector.broadcast %0 : f32 to vector<16x128xf32>
    %33 = arith.mulf %32, %29 : vector<16x128xf32>
    %34 = arith.select %31, %29, %33 : vector<16x128xi1>, vector<16x128xf32>
    %35 = arith.truncf %34 : vector<16x128xf32> to vector<16x128xbf16>
    %c0_19 = arith.constant 0 : index
    %c0_20 = arith.constant 0 : index
    %36 = vector.load %arg9[%c0_19, %c0_20] : memref<128x128xbf16, #tpu.memory_space<vmem>>, vector<128x128xbf16>
    %cst_21 = arith.constant dense<0.000000e+00> : vector<16x128xf32>
    %37 = tpu.matmul %35, %36, %cst_21 {dimension_numbers = #tpu.dot_dimension_numbers<[1], [0], [0], [1], [0, 0, 1, 1], [], []>} : vector<16x128xbf16>, vector<128x128xbf16>, vector<16x128xf32> -> vector<16x128xf32>
    %c0_22 = arith.constant 0 : index
    %c0_23 = arith.constant 0 : index
    %38 = vector.load %arg10[%c0_22, %c0_23] : memref<1x128xf32, #tpu.memory_space<vmem>>, vector<1x128xf32>
    %39 = vector.broadcast %38 : vector<1x128xf32> to vector<16x128xf32>
    %40 = arith.addf %37, %39 : vector<16x128xf32>
    %c0_24 = arith.constant 0 : index
    %c0_25 = arith.constant 0 : index
    %41 = vector.load %arg11[%c0_24, %c0_25] : memref<16x128xf32, #tpu.memory_space<vmem>>, vector<16x128xf32>
    tpu.vector_store %arg11[%c0_24, %c0_25], %40 {strides = array<i32>} : memref<16x128xf32, #tpu.memory_space<vmem>>, vector<16x128xf32>,
    return
  }
  func.func @transform_0(%arg0: i32) -> i32 {
    %c0_i32 = arith.constant 0 : i32
    %c0_i32_0 = arith.constant 0 : i32
    return %c0_i32 : i32
  }
  func.func @transform_1(%arg0: i32) -> (i32, i32) {
    %c0_i32 = arith.constant 0 : i32
    %c0_i32_0 = arith.constant 0 : i32
    return %arg0, %c0_i32 : i32, i32
  }
  func.func @transform_2(%arg0: i32) -> (i32, i32) {
    %c0_i32 = arith.constant 0 : i32
    %c0_i32_0 = arith.constant 0 : i32
    %c0_i32_1 = arith.constant 0 : i32
    return %c0_i32, %c0_i32_0 : i32, i32
  }
  func.func @transform_3(%arg0: i32) -> (i32, i32) {
    %c0_i32 = arith.constant 0 : i32
    %c0_i32_0 = arith.constant 0 : i32
    %c0_i32_1 = arith.constant 0 : i32
    return %c0_i32, %c0_i32_0 : i32, i32
  }
  func.func @transform_4(%arg0: i32) -> (i32, i32) {
    %c0_i32 = arith.constant 0 : i32
    %c0_i32_0 = arith.constant 0 : i32
    %c0_i32_1 = arith.constant 0 : i32
    return %c0_i32, %c0_i32_0 : i32, i32
  }
  func.func @transform_5(%arg0: i32) -> (i32, i32) {
    %c0_i32 = arith.constant 0 : i32
    %c0_i32_0 = arith.constant 0 : i32
    %c0_i32_1 = arith.constant 0 : i32
    return %c0_i32, %c0_i32_0 : i32, i32
  }
  func.func @transform_6(%arg0: i32) -> (i32, i32) {
    %c0_i32 = arith.constant 0 : i32
    %c0_i32_0 = arith.constant 0 : i32
    %c0_i32_1 = arith.constant 0 : i32
    return %c0_i32, %c0_i32_0 : i32, i32
  }
  func.func @transform_7(%arg0: i32) -> (i32, i32) {
    %c0_i32 = arith.constant 0 : i32
    %c0_i32_0 = arith.constant 0 : i32
    %c0_i32_1 = arith.constant 0 : i32
    return %c0_i32, %c0_i32_0 : i32, i32
  }
  func.func @transform_8(%arg0: i32) -> (i32, i32) {
    %c0_i32 = arith.constant 0 : i32
    %c0_i32_0 = arith.constant 0 : i32
    %c0_i32_1 = arith.constant 0 : i32
    return %c0_i32, %c0_i32_0 : i32, i32
  }
  func.func @transform_9(%arg0: i32) -> (i32, i32) {
    %c0_i32 = arith.constant 0 : i32
    %c0_i32_0 = arith.constant 0 : i32
    %c0_i32_1 = arith.constant 0 : i32
    return %c0_i32, %c0_i32_0 : i32, i32
  }
  func.func @transform_10(%arg0: i32) -> (i32, i32) {
    %c0_i32 = arith.constant 0 : i32
    %c0_i32_0 = arith.constant 0 : i32
    return %arg0, %c0_i32 : i32, i32
  }
}

</mosaic_0001>

<llo_original>
// kernel: tpu_custom_call.1
$region0: #{tpu_custom_call.1}
  #allocation0 [shape = 'u32[]', space=smem, size = 0x4, offset = 0x4, fixed_abs, tag = 'smem constant byte address 0x4 - core index']
  #allocation1 [shape = 'u32[144,128]{1,0:T(1,128)}', space=vmem, size = 0x12000, scoped, tag = 'internal scratch']
  #allocation2 [shape = 'f32[1]{0:T(128)S(6)}', space=smem, size = 0x200, scoped, tag = 'scoped memory for tpu_custom_call.1']
  %s0 = inlined_call_operand.<no memory space> [shape: f32[1], index: 0, kind: input, shape index: {}]
  %s1 = inlined_call_operand.hbm [shape: f32[16,32], index: 1, kind: input, shape index: {}]
  %s2 = inlined_call_operand.hbm [shape: bf16[32,128], index: 2, kind: input, shape index: {}]
  %s3 = inlined_call_operand.vmem [shape: f32[1,128], index: 3, kind: input, shape index: {}]
  %s4 = inlined_call_operand.hbm [shape: bf16[128,128], index: 4, kind: input, shape index: {}]
  %s5 = inlined_call_operand.vmem [shape: f32[1,128], index: 5, kind: input, shape index: {}]
  %s6 = inlined_call_operand.hbm [shape: bf16[128,128], index: 6, kind: input, shape index: {}]
  %s7 = inlined_call_operand.vmem [shape: f32[1,128], index: 7, kind: input, shape index: {}]
  %s8 = inlined_call_operand.hbm [shape: bf16[128,128], index: 8, kind: input, shape index: {}]
  %s9 = inlined_call_operand.vmem [shape: f32[1,128], index: 9, kind: input, shape index: {}]
  %s10 = inlined_call_operand.hbm [shape: f32[16,128], index: 10, kind: output, shape index: {}]
  %s11 = sld [smem:[#allocation0]]
  $region70: #{tpu_custom_call.1} parent=0
    _
  %s13 = ssub.s32 1, %s11
  %s14 = scalar_select 0, %s13, %s11
  %15 = sst [smem:[#allocation2]] %s0
  $region1: #{tpu_custom_call.1} parent=0
    #allocation3 [shape = 'u8[8192]{0}', space=vmem, size = 0x2000, scoped, tag = 'input window, operand 1, single buffered']
    #allocation4 [shape = 's32[1]{0}', space=sflag, size = 0x4, scoped, tag = 'scoped memory for tpu_custom_call.1']
    #allocation5 [shape = 's32[1]{0}', space=sflag, size = 0x4, scoped, tag = 'scoped memory for tpu_custom_call.1']
    #allocation6 [shape = 'u8[8192]{0}', space=vmem, size = 0x2000, scoped, tag = 'input window, operand 2, single buffered']
    #allocation7 [shape = 's32[1]{0}', space=sflag, size = 0x4, scoped, tag = 'scoped memory for tpu_custom_call.1']
    #allocation8 [shape = 'u8[32768]{0}', space=vmem, size = 0x8000, scoped, tag = 'input window, operand 4, single buffered']
    #allocation9 [shape = 'u8[32768]{0}', space=vmem, size = 0x8000, scoped, tag = 'input window, operand 6, single buffered']
    #allocation10 [shape = 's32[1]{0}', space=sflag, size = 0x4, scoped, tag = 'scoped memory for tpu_custom_call.1']
    #allocation11 [shape = 'u8[32768]{0}', space=vmem, size = 0x8000, scoped, tag = 'input window, operand 8, single buffered']
    #allocation12 [shape = 'u8[8192]{0}', space=vmem, size = 0x2000, scoped, tag = 'output window, operand 0, single buffered']
    %16 = vsyncpa [#allocation4], 0
    %17 = vsyncpa [#allocation7], 0
    %18 = vsyncpa [#allocation10], 0
    %19 = vsyncpa [#allocation5], 0
    // Predicated region
    $region2: #{tpu_custom_call.1} parent=1 // pred_check
      _
    $region3: #{tpu_custom_call.1} parent=1 // pred_check_branch
      %21 = sbr.rel (0) target = $region5
    $region4: #{tpu_custom_call.1} parent=1 // pred_region
      _
    $region5: #{tpu_custom_call.1} parent=1 // pred_fallthru
      _
    // Predicated region
    $region6: #{tpu_custom_call.1} parent=1 // pred_check
      _
    $region7: #{tpu_custom_call.1} parent=1 // pred_check_branch
      %23 = sbr.rel (0) target = $region9
    $region8: #{tpu_custom_call.1} parent=1 // pred_region
      %s25 = ssub.s32 256, 256
      %26 = vsyncadd [#allocation4], %s25
      %s27 = sshll.u32 [#allocation3], 4
      %s28 = int_to_ptr.vmem [resolvable:$true] %s27
      %33 = dma.hbm_to_vmem [thread:$0]  %s1, 256, %s28, [#allocation4], 128, 128, 8
    $region9: #{tpu_custom_call.1} parent=1 // pred_fallthru
      _
    // Predicated region
    $region10: #{tpu_custom_call.1} parent=1 // pred_check
      _
    $region11: #{tpu_custom_call.1} parent=1 // pred_check_branch
      %35 = sbr.rel (0) target = $region13
    $region12: #{tpu_custom_call.1} parent=1 // pred_region
      %s37 = ssub.s32 256, 256
      %38 = vsyncadd [#allocation7], %s37
      %s39 = sshll.u32 [#allocation6], 4
      %s40 = int_to_ptr.vmem [resolvable:$true] %s39
      %45 = dma.hbm_to_vmem [thread:$0]  %s2, 256, %s40, [#allocation7], 64, 64, 4
    $region13: #{tpu_custom_call.1} parent=1 // pred_fallthru
      _
    // Predicated region
    $region14: #{tpu_custom_call.1} parent=1 // pred_check
      _
    $region15: #{tpu_custom_call.1} parent=1 // pred_check_branch
      %47 = sbr.rel (0) target = $region17
    $region16: #{tpu_custom_call.1} parent=1 // pred_region
      _
    $region17: #{tpu_custom_call.1} parent=1 // pred_fallthru
      _
    // Predicated region
    $region18: #{tpu_custom_call.1} parent=1 // pred_check
      _
    $region19: #{tpu_custom_call.1} parent=1 // pred_check_branch
      %49 = sbr.rel (0) target = $region21
    $region20: #{tpu_custom_call.1} parent=1 // pred_region
      %s51 = ssub.s32 1024, 1024
      %52 = vsyncadd [#allocation7], %s51
      %s53 = sshll.u32 [#allocation8], 4
      %s54 = int_to_ptr.vmem [resolvable:$true] %s53
      %59 = dma.hbm_to_vmem [thread:$0]  %s4, 1024, %s54, [#allocation7], 64, 64, 4
    $region21: #{tpu_custom_call.1} parent=1 // pred_fallthru
      _
    // Predicated region
    $region22: #{tpu_custom_call.1} parent=1 // pred_check
      _
    $region23: #{tpu_custom_call.1} parent=1 // pred_check_branch
      %61 = sbr.rel (0) target = $region25
    $region24: #{tpu_custom_call.1} parent=1 // pred_region
      _
    $region25: #{tpu_custom_call.1} parent=1 // pred_fallthru
      _
    // Predicated region
    $region26: #{tpu_custom_call.1} parent=1 // pred_check
      _
    $region27: #{tpu_custom_call.1} parent=1 // pred_check_branch
      %63 = sbr.rel (0) target = $region29
    $region28: #{tpu_custom_call.1} parent=1 // pred_region
      %s65 = ssub.s32 1024, 1024
      %66 = vsyncadd [#allocation10], %s65
      %s67 = sshll.u32 [#allocation9], 4
      %s68 = int_to_ptr.vmem [resolvable:$true] %s67
      %73 = dma.hbm_to_vmem [thread:$0]  %s6, 1024, %s68, [#allocation10], 64, 64, 4
    $region29: #{tpu_custom_call.1} parent=1 // pred_fallthru
      _
    // Predicated region
    $region30: #{tpu_custom_call.1} parent=1 // pred_check
      _
    $region31: #{tpu_custom_call.1} parent=1 // pred_check_branch
      %75 = sbr.rel (0) target = $region33
    $region32: #{tpu_custom_call.1} parent=1 // pred_region
      _
    $region33: #{tpu_custom_call.1} parent=1 // pred_fallthru
      _
    // Predicated region
    $region34: #{tpu_custom_call.1} parent=1 // pred_check
      _
    $region35: #{tpu_custom_call.1} parent=1 // pred_check_branch
      %77 = sbr.rel (0) target = $region37
    $region36: #{tpu_custom_call.1} parent=1 // pred_region
      %s79 = ssub.s32 1024, 1024
      %80 = vsyncadd [#allocation10], %s79
      %s81 = sshll.u32 [#allocation11], 4
      %s82 = int_to_ptr.vmem [resolvable:$true] %s81
      %87 = dma.hbm_to_vmem [thread:$0]  %s8, 1024, %s82, [#allocation10], 64, 64, 4
    $region37: #{tpu_custom_call.1} parent=1 // pred_fallthru
      _
    // Predicated region
    $region38: #{tpu_custom_call.1} parent=1 // pred_check
      _
    $region39: #{tpu_custom_call.1} parent=1 // pred_check_branch
      %89 = sbr.rel (0) target = $region41
    $region40: #{tpu_custom_call.1} parent=1 // pred_region
      _
    $region41: #{tpu_custom_call.1} parent=1 // pred_fallthru
      _
    // Predicated region
    $region42: #{tpu_custom_call.1} parent=1 // pred_check
      _
    $region43: #{tpu_custom_call.1} parent=1 // pred_check_branch
      %91 = sbr.rel (0) target = $region45
    $region44: #{tpu_custom_call.1} parent=1 // pred_region
      %92 = dma.done [#allocation4], 256
    $region45: #{tpu_custom_call.1} parent=1 // pred_fallthru
      _
    // Predicated region
    $region46: #{tpu_custom_call.1} parent=1 // pred_check
      _
    $region47: #{tpu_custom_call.1} parent=1 // pred_check_branch
      %94 = sbr.rel (0) target = $region49
    $region48: #{tpu_custom_call.1} parent=1 // pred_region
      %95 = dma.done [#allocation7], 256
    $region49: #{tpu_custom_call.1} parent=1 // pred_fallthru
      _
    // Predicated region
    $region50: #{tpu_custom_call.1} parent=1 // pred_check
      _
    $region51: #{tpu_custom_call.1} parent=1 // pred_check_branch
      %97 = sbr.rel (0) target = $region53
    $region52: #{tpu_custom_call.1} parent=1 // pred_region
      %98 = dma.done [#allocation7], 1024
    $region53: #{tpu_custom_call.1} parent=1 // pred_fallthru
      _
    // Predicated region
    $region54: #{tpu_custom_call.1} parent=1 // pred_check
      _
    $region55: #{tpu_custom_call.1} parent=1 // pred_check_branch
      %100 = sbr.rel (0) target = $region57
    $region56: #{tpu_custom_call.1} parent=1 // pred_region
      %101 = dma.done [#allocation10], 1024
    $region57: #{tpu_custom_call.1} parent=1 // pred_fallthru
      _
    // Predicated region
    $region58: #{tpu_custom_call.1} parent=1 // pred_check
      _
    $region59: #{tpu_custom_call.1} parent=1 // pred_check_branch
      %103 = sbr.rel (0) target = $region61
    $region60: #{tpu_custom_call.1} parent=1 // pred_region
      %104 = dma.done [#allocation10], 1024
    $region61: #{tpu_custom_call.1} parent=1 // pred_fallthru
      _
    %s106 = sld [smem:[#allocation2]]
    %v107 = vld [vmem:[#allocation3] sm:$0xff]
    %v108 = vld [vmem:[#allocation3 + $0x8] sm:$0xff]
    %v109 = vpack.c.bf16 %v108, %v107
    %v110 = vld [vmem:[#allocation6] sm:$0xf]
    %v111 = vld [vmem:[#allocation6 + $0x4] sm:$0xf]
    %v112 = vld [vmem:[#allocation6 + $0x8] sm:$0xf]
    %v113 = vld [vmem:[#allocation6 + $0xc] sm:$0xf]
    %v114 = vld [vmem:[%s3] sm:$0x1]
    %v116 = vlaneseq
    %v117 = vshrl.u32 %v116, 7
    %v118 = vsub.s32 0, %v117
    %v119 = vrot.slane %v114, %v118
    %v125 = vunpack.c.l.b16 %v110
    %v126 = vunpack.c.l.b16 %v111
    %v127 = vunpack.c.l.b16 %v112
    %v128 = vunpack.c.l.b16 %v113
    %v129 = vpack.c.b16 %v126, %v125
    %v130 = vpack.c.b16 %v128, %v127
    %vm133 = vcmask 261120
    %v135 = vsel %vm133, %v109, 0
    %137 = vmatprep.subr.bf16.mxu0 0
    %138 = vmatpush1.bf16.msra.mxu0 0
    %139 = vmatprep.subr.bf16.mxu0 0
    %140 = vmatpush1.bf16.msra.mxu0 0
    %141 = vmatprep.subr.bf16.mxu0 0
    %142 = vmatpush1.bf16.msra.mxu0 0
    %143 = vmatprep.subr.bf16.mxu0 0
    %144 = vmatpush1.bf16.msra.mxu0 0
    %145 = vmatprep.subr.bf16.mxu0 0
    %146 = vmatpush1.bf16.msra.mxu0 0
    %147 = vmatprep.subr.bf16.mxu0 0
    %148 = vmatpush1.bf16.msra.mxu0 0
    %149 = vmatprep.subr.bf16.mxu0 0
    %150 = vmatpush1.bf16.msra.mxu0 %v130
    %151 = vmatprep.subr.bf16.mxu0 0
    %152 = vmatpush1.bf16.msra.mxu0 %v129
    %153 = vmatprep.subr.bf16.mxu0 0
    %154 = vmatpush2.bf16.msra.mxu0 0
    %155 = vmatprep.subr.bf16.mxu0 0
    %156 = vmatpush2.bf16.msra.mxu0 0
    %157 = vmatprep.subr.bf16.mxu0 0
    %158 = vmatpush2.bf16.msra.mxu0 0
    %159 = vmatprep.subr.bf16.mxu0 0
    %160 = vmatpush2.bf16.msra.mxu0 0
    %161 = vmatprep.subr.bf16.mxu0 0
    %162 = vmatpush2.bf16.msra.mxu0 0
    %163 = vmatprep.subr.bf16.mxu0 0
    %164 = vmatpush2.bf16.msra.mxu0 0
    %165 = vmatprep.subr.bf16.mxu0 0
    %166 = vmatpush2.bf16.msra.mxu0 0
    %167 = vmatprep.subr.bf16.mxu0 0
    %168 = vmatpush2.bf16.msra.mxu0 0
    %169 = vmatprep.mubr.bf16.mxu0 0
    %170 = vmatmul.mubr.bf16.gmra.mxu0 %v135
    %v171 = vpop.f32.mrf.mxu0
    %v172 = vadd.f32 %v119, %v171
    %v173 = vpop.f32.mrf.mxu0
    %v174 = vpop.f32.mrf.mxu0
    %v175 = vadd.f32 %v119, %v174
    %v176 = vpop.f32.mrf.mxu0
    %177 = vdwg.mxu0
    %vm178 = vcmp.ge.f32.partialorder %v172, 0.0
    %vm179 = vcmp.ge.f32.partialorder %v175, 0.0
    %v180 = vstv %s106
    %v181 = vmul.f32 %v180, %v172
    %v182 = vmul.f32 %v180, %v175
    %v183 = vsel %vm178, %v172, %v181
    %v184 = vsel %vm179, %v175, %v182
    %v185 = vpack.c.bf16 %v184, %v183
    %v186 = vld [vmem:[#allocation8] sm:$0xf]
    %v187 = vld [vmem:[#allocation8 + $0x4] sm:$0xf]
    %v188 = vld [vmem:[#allocation8 + $0x8] sm:$0xf]
    %v189 = vld [vmem:[#allocation8 + $0xc] sm:$0xf]
    %v190 = vld [vmem:[#allocation8 + $0x10] sm:$0xf]
    %v191 = vld [vmem:[#allocation8 + $0x14] sm:$0xf]
    %v192 = vld [vmem:[#allocation8 + $0x18] sm:$0xf]
    %v193 = vld [vmem:[#allocation8 + $0x1c] sm:$0xf]
    %v194 = vld [vmem:[#allocation8 + $0x20] sm:$0xf]
    %v195 = vld [vmem:[#allocation8 + $0x24] sm:$0xf]
    %v196 = vld [vmem:[#allocation8 + $0x28] sm:$0xf]
    %v197 = vld [vmem:[#allocation8 + $0x2c] sm:$0xf]
    %v198 = vld [vmem:[#allocation8 + $0x30] sm:$0xf]
    %v199 = vld [vmem:[#allocation8 + $0x34] sm:$0xf]
    %v200 = vld [vmem:[#allocation8 + $0x38] sm:$0xf]
    %v201 = vld [vmem:[#allocation8 + $0x3c] sm:$0xf]
    %v202 = vld [vmem:[%s5] sm:$0x1]
    %v204 = vlaneseq
    %v205 = vshrl.u32 %v204, 7
    %v206 = vsub.s32 0, %v205
    %v207 = vrot.slane %v202, %v206
    %v225 = vunpack.c.l.b16 %v186
    %v226 = vunpack.c.l.b16 %v187
    %v227 = vunpack.c.l.b16 %v188
    %v228 = vunpack.c.l.b16 %v189
    %v229 = vunpack.c.l.b16 %v190
    %v230 = vunpack.c.l.b16 %v191
    %v231 = vunpack.c.l.b16 %v192
    %v232 = vunpack.c.l.b16 %v193
    %v233 = vunpack.c.l.b16 %v194
    %v234 = vunpack.c.l.b16 %v195
    %v235 = vunpack.c.l.b16 %v196
    %v236 = vunpack.c.l.b16 %v197
    %v237 = vunpack.c.l.b16 %v198
    %v238 = vunpack.c.l.b16 %v199
    %v239 = vunpack.c.l.b16 %v200
    %v240 = vunpack.c.l.b16 %v201
    %v241 = vpack.c.b16 %v226, %v225
    %v242 = vpack.c.b16 %v228, %v227
    %v243 = vpack.c.b16 %v230, %v229
    %v244 = vpack.c.b16 %v232, %v231
    %v245 = vpack.c.b16 %v234, %v233
    %v246 = vpack.c.b16 %v236, %v235
    %v247 = vpack.c.b16 %v238, %v237
    %v248 = vpack.c.b16 %v240, %v239
    %257 = vmatprep.subr.bf16.mxu0 0
    %258 = vmatpush1.bf16.msra.mxu0 %v248
    %259 = vmatprep.subr.bf16.mxu0 0
    %260 = vmatpush1.bf16.msra.mxu0 %v247
    %261 = vmatprep.subr.bf16.mxu0 0
    %262 = vmatpush1.bf16.msra.mxu0 %v246
    %263 = vmatprep.subr.bf16.mxu0 0
    %264 = vmatpush1.bf16.msra.mxu0 %v245
    %265 = vmatprep.subr.bf16.mxu0 0
    %266 = vmatpush1.bf16.msra.mxu0 %v244
    %267 = vmatprep.subr.bf16.mxu0 0
    %268 = vmatpush1.bf16.msra.mxu0 %v243
    %269 = vmatprep.subr.bf16.mxu0 0
    %270 = vmatpush1.bf16.msra.mxu0 %v242
    %271 = vmatprep.subr.bf16.mxu0 0
    %272 = vmatpush1.bf16.msra.mxu0 %v241
    %273 = vmatprep.subr.bf16.mxu0 0
    %274 = vmatpush2.bf16.msra.mxu0 0
    %275 = vmatprep.subr.bf16.mxu0 0
    %276 = vmatpush2.bf16.msra.mxu0 0
    %277 = vmatprep.subr.bf16.mxu0 0
    %278 = vmatpush2.bf16.msra.mxu0 0
    %279 = vmatprep.subr.bf16.mxu0 0
    %280 = vmatpush2.bf16.msra.mxu0 0
    %281 = vmatprep.subr.bf16.mxu0 0
    %282 = vmatpush2.bf16.msra.mxu0 0
    %283 = vmatprep.subr.bf16.mxu0 0
    %284 = vmatpush2.bf16.msra.mxu0 0
    %285 = vmatprep.subr.bf16.mxu0 0
    %286 = vmatpush2.bf16.msra.mxu0 0
    %287 = vmatprep.subr.bf16.mxu0 0
    %288 = vmatpush2.bf16.msra.mxu0 0
    %289 = vmatprep.mubr.bf16.mxu0 0
    %290 = vmatmul.mubr.bf16.gmra.mxu0 %v185
    %v291 = vpop.f32.mrf.mxu0
    %v292 = vadd.f32 %v207, %v291
    %v293 = vpop.f32.mrf.mxu0
    %v294 = vpop.f32.mrf.mxu0
    %v295 = vadd.f32 %v207, %v294
    %v296 = vpop.f32.mrf.mxu0
    %297 = vdwg.mxu0
    %vm298 = vcmp.ge.f32.partialorder %v292, 0.0
    %vm299 = vcmp.ge.f32.partialorder %v295, 0.0
    %v300 = vmul.f32 %v180, %v292
    %v301 = vmul.f32 %v180, %v295
    %v302 = vsel %vm298, %v292, %v300
    %v303 = vsel %vm299, %v295, %v301
    %v304 = vpack.c.bf16 %v303, %v302
    %v305 = vld [vmem:[#allocation9] sm:$0xf]
    %v306 = vld [vmem:[#allocation9 + $0x4] sm:$0xf]
    %v307 = vld [vmem:[#allocation9 + $0x8] sm:$0xf]
    %v308 = vld [vmem:[#allocation9 + $0xc] sm:$0xf]
    %v309 = vld [vmem:[#allocation9 + $0x10] sm:$0xf]
    %v310 = vld [vmem:[#allocation9 + $0x14] sm:$0xf]
    %v311 = vld [vmem:[#allocation9 + $0x18] sm:$0xf]
    %v312 = vld [vmem:[#allocation9 + $0x1c] sm:$0xf]
    %v313 = vld [vmem:[#allocation9 + $0x20] sm:$0xf]
    %v314 = vld [vmem:[#allocation9 + $0x24] sm:$0xf]
    %v315 = vld [vmem:[#allocation9 + $0x28] sm:$0xf]
    %v316 = vld [vmem:[#allocation9 + $0x2c] sm:$0xf]
    %v317 = vld [vmem:[#allocation9 + $0x30] sm:$0xf]
    %v318 = vld [vmem:[#allocation9 + $0x34] sm:$0xf]
    %v319 = vld [vmem:[#allocation9 + $0x38] sm:$0xf]
    %v320 = vld [vmem:[#allocation9 + $0x3c] sm:$0xf]
    %v321 = vld [vmem:[%s7] sm:$0x1]
    %v323 = vlaneseq
    %v324 = vshrl.u32 %v323, 7
    %v325 = vsub.s32 0, %v324
    %v326 = vrot.slane %v321, %v325
    %v344 = vunpack.c.l.b16 %v305
    %v345 = vunpack.c.l.b16 %v306
    %v346 = vunpack.c.l.b16 %v307
    %v347 = vunpack.c.l.b16 %v308
    %v348 = vunpack.c.l.b16 %v309
    %v349 = vunpack.c.l.b16 %v310
    %v350 = vunpack.c.l.b16 %v311
    %v351 = vunpack.c.l.b16 %v312
    %v352 = vunpack.c.l.b16 %v313
    %v353 = vunpack.c.l.b16 %v314
    %v354 = vunpack.c.l.b16 %v315
    %v355 = vunpack.c.l.b16 %v316
    %v356 = vunpack.c.l.b16 %v317
    %v357 = vunpack.c.l.b16 %v318
    %v358 = vunpack.c.l.b16 %v319
    %v359 = vunpack.c.l.b16 %v320
    %v360 = vpack.c.b16 %v345, %v344
    %v361 = vpack.c.b16 %v347, %v346
    %v362 = vpack.c.b16 %v349, %v348
    %v363 = vpack.c.b16 %v351, %v350
    %v364 = vpack.c.b16 %v353, %v352
    %v365 = vpack.c.b16 %v355, %v354
    %v366 = vpack.c.b16 %v357, %v356
    %v367 = vpack.c.b16 %v359, %v358
    %376 = vmatprep.subr.bf16.mxu0 0
    %377 = vmatpush1.bf16.msra.mxu0 %v367
    %378 = vmatprep.subr.bf16.mxu0 0
    %379 = vmatpush1.bf16.msra.mxu0 %v366
    %380 = vmatprep.subr.bf16.mxu0 0
    %381 = vmatpush1.bf16.msra.mxu0 %v365
    %382 = vmatprep.subr.bf16.mxu0 0
    %383 = vmatpush1.bf16.msra.mxu0 %v364
    %384 = vmatprep.subr.bf16.mxu0 0
    %385 = vmatpush1.bf16.msra.mxu0 %v363
    %386 = vmatprep.subr.bf16.mxu0 0
    %387 = vmatpush1.bf16.msra.mxu0 %v362
    %388 = vmatprep.subr.bf16.mxu0 0
    %389 = vmatpush1.bf16.msra.mxu0 %v361
    %390 = vmatprep.subr.bf16.mxu0 0
    %391 = vmatpush1.bf16.msra.mxu0 %v360
    %392 = vmatprep.subr.bf16.mxu0 0
    %393 = vmatpush2.bf16.msra.mxu0 0
    %394 = vmatprep.subr.bf16.mxu0 0
    %395 = vmatpush2.bf16.msra.mxu0 0
    %396 = vmatprep.subr.bf16.mxu0 0
    %397 = vmatpush2.bf16.msra.mxu0 0
    %398 = vmatprep.subr.bf16.mxu0 0
    %399 = vmatpush2.bf16.msra.mxu0 0
    %400 = vmatprep.subr.bf16.mxu0 0
    %401 = vmatpush2.bf16.msra.mxu0 0
    %402 = vmatprep.subr.bf16.mxu0 0
    %403 = vmatpush2.bf16.msra.mxu0 0
    %404 = vmatprep.subr.bf16.mxu0 0
    %405 = vmatpush2.bf16.msra.mxu0 0
    %406 = vmatprep.subr.bf16.mxu0 0
    %407 = vmatpush2.bf16.msra.mxu0 0
    %408 = vmatprep.mubr.bf16.mxu0 0
    %409 = vmatmul.mubr.bf16.gmra.mxu0 %v304
    %v410 = vpop.f32.mrf.mxu0
    %v411 = vadd.f32 %v326, %v410
    %v412 = vpop.f32.mrf.mxu0
    %v413 = vpop.f32.mrf.mxu0
    %v414 = vadd.f32 %v326, %v413
    %v415 = vpop.f32.mrf.mxu0
    %416 = vdwg.mxu0
    %vm417 = vcmp.ge.f32.partialorder %v411, 0.0
    %vm418 = vcmp.ge.f32.partialorder %v414, 0.0
    %v419 = vmul.f32 %v180, %v411
    %v420 = vmul.f32 %v180, %v414
    %v421 = vsel %vm417, %v411, %v419
    %v422 = vsel %vm418, %v414, %v420
    %v423 = vpack.c.bf16 %v422, %v421
    %v424 = vld [vmem:[#allocation11] sm:$0xf]
    %v425 = vld [vmem:[#allocation11 + $0x4] sm:$0xf]
    %v426 = vld [vmem:[#allocation11 + $0x8] sm:$0xf]
    %v427 = vld [vmem:[#allocation11 + $0xc] sm:$0xf]
    %v428 = vld [vmem:[#allocation11 + $0x10] sm:$0xf]
    %v429 = vld [vmem:[#allocation11 + $0x14] sm:$0xf]
    %v430 = vld [vmem:[#allocation11 + $0x18] sm:$0xf]
    %v431 = vld [vmem:[#allocation11 + $0x1c] sm:$0xf]
    %v432 = vld [vmem:[#allocation11 + $0x20] sm:$0xf]
    %v433 = vld [vmem:[#allocation11 + $0x24] sm:$0xf]
    %v434 = vld [vmem:[#allocation11 + $0x28] sm:$0xf]
    %v435 = vld [vmem:[#allocation11 + $0x2c] sm:$0xf]
    %v436 = vld [vmem:[#allocation11 + $0x30] sm:$0xf]
    %v437 = vld [vmem:[#allocation11 + $0x34] sm:$0xf]
    %v438 = vld [vmem:[#allocation11 + $0x38] sm:$0xf]
    %v439 = vld [vmem:[#allocation11 + $0x3c] sm:$0xf]
    %v440 = vld [vmem:[%s9] sm:$0x1]
    %v442 = vlaneseq
    %v443 = vshrl.u32 %v442, 7
    %v444 = vsub.s32 0, %v443
    %v445 = vrot.slane %v440, %v444
    %v463 = vunpack.c.l.b16 %v424
    %v464 = vunpack.c.l.b16 %v425
    %v465 = vunpack.c.l.b16 %v426
    %v466 = vunpack.c.l.b16 %v427
    %v467 = vunpack.c.l.b16 %v428
    %v468 = vunpack.c.l.b16 %v429
    %v469 = vunpack.c.l.b16 %v430
    %v470 = vunpack.c.l.b16 %v431
    %v471 = vunpack.c.l.b16 %v432
    %v472 = vunpack.c.l.b16 %v433
    %v473 = vunpack.c.l.b16 %v434
    %v474 = vunpack.c.l.b16 %v435
    %v475 = vunpack.c.l.b16 %v436
    %v476 = vunpack.c.l.b16 %v437
    %v477 = vunpack.c.l.b16 %v438
    %v478 = vunpack.c.l.b16 %v439
    %v479 = vpack.c.b16 %v464, %v463
    %v480 = vpack.c.b16 %v466, %v465
    %v481 = vpack.c.b16 %v468, %v467
    %v482 = vpack.c.b16 %v470, %v469
    %v483 = vpack.c.b16 %v472, %v471
    %v484 = vpack.c.b16 %v474, %v473
    %v485 = vpack.c.b16 %v476, %v475
    %v486 = vpack.c.b16 %v478, %v477
    %495 = vmatprep.subr.bf16.mxu0 0
    %496 = vmatpush1.bf16.msra.mxu0 %v486
    %497 = vmatprep.subr.bf16.mxu0 0
    %498 = vmatpush1.bf16.msra.mxu0 %v485
    %499 = vmatprep.subr.bf16.mxu0 0
    %500 = vmatpush1.bf16.msra.mxu0 %v484
    %501 = vmatprep.subr.bf16.mxu0 0
    %502 = vmatpush1.bf16.msra.mxu0 %v483
    %503 = vmatprep.subr.bf16.mxu0 0
    %504 = vmatpush1.bf16.msra.mxu0 %v482
    %505 = vmatprep.subr.bf16.mxu0 0
    %506 = vmatpush1.bf16.msra.mxu0 %v481
    %507 = vmatprep.subr.bf16.mxu0 0
    %508 = vmatpush1.bf16.msra.mxu0 %v480
    %509 = vmatprep.subr.bf16.mxu0 0
    %510 = vmatpush1.bf16.msra.mxu0 %v479
    %511 = vmatprep.subr.bf16.mxu0 0
    %512 = vmatpush2.bf16.msra.mxu0 0
    %513 = vmatprep.subr.bf16.mxu0 0
    %514 = vmatpush2.bf16.msra.mxu0 0
    %515 = vmatprep.subr.bf16.mxu0 0
    %516 = vmatpush2.bf16.msra.mxu0 0
    %517 = vmatprep.subr.bf16.mxu0 0
    %518 = vmatpush2.bf16.msra.mxu0 0
    %519 = vmatprep.subr.bf16.mxu0 0
    %520 = vmatpush2.bf16.msra.mxu0 0
    %521 = vmatprep.subr.bf16.mxu0 0
    %522 = vmatpush2.bf16.msra.mxu0 0
    %523 = vmatprep.subr.bf16.mxu0 0
    %524 = vmatpush2.bf16.msra.mxu0 0
    %525 = vmatprep.subr.bf16.mxu0 0
    %526 = vmatpush2.bf16.msra.mxu0 0
    %527 = vmatprep.mubr.bf16.mxu0 0
    %528 = vmatmul.mubr.bf16.gmra.mxu0 %v423
    %v529 = vpop.f32.mrf.mxu0
    %v530 = vadd.f32 %v445, %v529
    %v531 = vpop.f32.mrf.mxu0
    %v532 = vpop.f32.mrf.mxu0
    %v533 = vadd.f32 %v445, %v532
    %v534 = vpop.f32.mrf.mxu0
    %535 = vdwg.mxu0
    %536 = vst [vmem:[#allocation12] sm:$0xff] %v530
    %537 = vst [vmem:[#allocation12 + $0x8] sm:$0xff] %v533
    // Predicated region
    $region62: #{tpu_custom_call.1} parent=1 // pred_check
      _
    $region63: #{tpu_custom_call.1} parent=1 // pred_check_branch
      %539 = sbr.rel (0) target = $region65
    $region64: #{tpu_custom_call.1} parent=1 // pred_region
      %s541 = ssub.s32 256, 256
      %542 = vsyncadd [#allocation5], %s541
      %s543 = sshll.u32 [#allocation12], 4
      %s544 = int_to_ptr.vmem [resolvable:$true] %s543
      %549 = dma.vmem_to_hbm [thread:$0]  %s544, 256, %s10, [#allocation5], 128, 128, 8
    $region65: #{tpu_custom_call.1} parent=1 // pred_fallthru
      _
    // Predicated region
    $region66: #{tpu_custom_call.1} parent=1 // pred_check
      _
    $region67: #{tpu_custom_call.1} parent=1 // pred_check_branch
      %551 = sbr.rel (0) target = $region69
    $region68: #{tpu_custom_call.1} parent=1 // pred_region
      %552 = dma.done [#allocation5], 256
    $region69: #{tpu_custom_call.1} parent=1 // pred_fallthru
      _
    %553 = vsyncpa [#allocation4], 1
    %554 = vsyncpa [#allocation7], 1
    %555 = vsyncpa [#allocation10], 1
    %556 = vsyncpa [#allocation5], 1

</llo_original>
